<compile_context>
chip_gen: v7x
topology: tpu7x:2x2x1
jax: 0.10.0
libtpu: 0.0.40
codegen_flags: <defaults>
</compile_context>

<pallas_src>
import functools

import numpy as np
import jax
import jax.numpy as jnp
from jax.experimental import pallas as pl
from jax.experimental.pallas import tpu as pltpu

_EPS = 1e-5


# ------------------------------ Pallas kernel --------------------------------
def _upsample_conv_kernel(x_ref, g_ref, mh_ref, bias_ref, o_ref, *, wc_out):
    """One image of Upsample(2x, bilinear) + Conv3x3('same') + BN(eval).

    x_ref   : (1, H, W*C_in)          bf16 input rows, (W, C_in) flat on lanes
    g_ref   : (W*C_in, 3*Wout*C_out)  bf16 fused W-upsample x conv-cols x BN
                                      scale, three dy taps concatenated on lanes
    mh_ref  : (Hout, 3*H)             f32 fused H-upsample + dy-tap-sum operator
                                      (zero halo rows baked in)
    bias_ref: (1, Wout*C_out)         f32 conv bias + BN shift, tiled over Wout
    o_ref   : (1, Hout, Wout*C_out)   output rows (lane-dense, unmasked store)
    """
    # Heavy MXU matmul on the pre-H-upsample rows (b-invariant work hoisted:
    # Hout/H = 2x fewer FLOPs than applying G to upsampled rows), all three dy
    # taps in a single lane-dense bf16 matmul with f32 accumulation.
    p = jnp.dot(x_ref[0], g_ref[...],
                preferred_element_type=jnp.float32)           # (H, 3*Wout*C_out)

    # Restack the three dy lane-blocks onto sublanes: lane offsets are multiples
    # of 128 and H % 8 == 0, so this is pure vreg stacking (no cross-lane work).
    p_stk = jnp.concatenate(
        [p[:, dy * wc_out:(dy + 1) * wc_out] for dy in range(3)], axis=0)

    # Light matmul: H-upsample rows + conv dy-tap sum in one shot (f32, tiny).
    out = jnp.dot(mh_ref[...], p_stk,
                  preferred_element_type=jnp.float32)         # (Hout, Wout*C_out)

    o_ref[0] = (out + bias_ref[...]).astype(o_ref.dtype)


# --------------------------- host-side param folding -------------------------
def _upsample_matrix(size):
    """(2*size, size) matrix of PyTorch bilinear x2, align_corners=False."""
    m = np.zeros((2 * size, size), np.float32)
    for o in range(2 * size):
        s = max((o + 0.5) / 2.0 - 0.5, 0.0)      # PyTorch clamps negative coords
        i0 = int(np.floor(s))
        lam = s - i0
        i1 = min(i0 + 1, size - 1)
        i0 = min(i0, size - 1)
        m[o, i0] += 1.0 - lam
        m[o, i1] += lam
    return m


def prepare_params(w_oihw, conv_bias, gamma, beta, mean, var, *, H, W):
    """Fold upsample + conv + BN(eval) into the kernel's constant operands."""
    w = np.asarray(w_oihw, np.float32)           # (C_out, C_in, 3, 3)
    C_out, C_in = w.shape[0], w.shape[1]
    Hout, Wout = 2 * H, 2 * W
    Wp = Wout + 2

    # BN(eval) folded:  BN(conv(x)+cb) = conv(x)*s + (cb*s + beta - mean*s)
    s = np.asarray(gamma, np.float32) / np.sqrt(np.asarray(var, np.float32) + _EPS)
    bias_total = (np.asarray(conv_bias, np.float32) * s
                  + np.asarray(beta, np.float32) - np.asarray(mean, np.float32) * s)
    w_eff = w * s[:, None, None, None]           # BN scale folded into weights

    # H-direction operator with zero halo rows; the three dy taps are
    # concatenated along columns so the kernel's second matmul also sums the
    # taps:  out = sum_dy mh_pad[dy:dy+Hout] @ P_dy  ==  mh_cat @ [P_0;P_1;P_2].
    mh_pad = np.zeros((Hout + 2, H), np.float32)
    mh_pad[1:Hout + 1] = _upsample_matrix(H)
    mh_cat = np.concatenate([mh_pad[dy:dy + Hout] for dy in range(3)], axis=1)

    # W-direction upsample (x) identity over input channels, with halo columns.
    mw_pad = np.zeros((Wp, W), np.float32)
    mw_pad[1:Wout + 1] = _upsample_matrix(W)
    bigmw = np.kron(mw_pad.T, np.eye(C_in, dtype=np.float32))   # (W*C_in, Wp*C_in)

    # Banded (Toeplitz) 3x3 conv weights per dy tap (BN scale already folded).
    band = np.zeros((3, Wp * C_in, Wout * C_out), np.float32)
    for dy in range(3):
        for dx in range(3):
            blk = w_eff[:, :, dy, dx].T                          # (C_in, C_out)
            for oj in range(Wout):
                jw = oj + dx
                band[dy, jw * C_in:(jw + 1) * C_in,
                     oj * C_out:(oj + 1) * C_out] = blk

    # Fold the W-upsample into the conv slabs, concat the dy taps on lanes.
    g = np.stack([bigmw @ band[dy] for dy in range(3)])   # (3, W*C_in, Wout*C_out)
    g_cat = np.concatenate([g[0], g[1], g[2]], axis=1)    # (W*C_in, 3*Wout*C_out)

    return dict(
        g_cat=jnp.asarray(g_cat, dtype=jnp.bfloat16),     # bf16 MXU operand
        mh_cat=jnp.asarray(mh_cat),                       # f32 (tiny 2nd matmul)
        bias=jnp.asarray(np.tile(bias_total, Wout)[None, :]),   # (1, Wout*C_out)
        C_in=C_in, C_out=C_out,
    )


# --------------------------------- wrapper ------------------------------------
def upsample_plus_conv(x_nchw, params):
    """x_nchw: (N, 2*feature, H, W) f32 -> (N, feature, 2H, 2W) f32."""
    N, C_in, H, W = x_nchw.shape
    assert C_in == params["C_in"]
    C_out = params["C_out"]
    Hout, Wout = 2 * H, 2 * W
    wc_in, wc_out = W * C_in, Wout * C_out

    # NCHW -> (N, H, W*C_in) bf16: cheap wrapper plumbing; lane-dense input block
    # and half the input HBM traffic.
    x_flat = jnp.transpose(x_nchw, (0, 2, 3, 1)).reshape(N, H, wc_in)
    x_flat = x_flat.astype(jnp.bfloat16)

    kernel = functools.partial(_upsample_conv_kernel, wc_out=wc_out)

    out_flat = pl.pallas_call(
        kernel,
        out_shape=jax.ShapeDtypeStruct((N, Hout, wc_out), jnp.float32),
        grid_spec=pltpu.PrefetchScalarGridSpec(
            num_scalar_prefetch=0,
            grid=(N,),
            in_specs=[
                pl.BlockSpec((1, H, wc_in), lambda n: (n, 0, 0)),
                pl.BlockSpec((wc_in, 3 * wc_out), lambda n: (0, 0)),
                pl.BlockSpec((Hout, 3 * H), lambda n: (0, 0)),
                pl.BlockSpec((1, wc_out), lambda n: (0, 0)),
            ],
            out_specs=pl.BlockSpec((1, Hout, wc_out), lambda n: (n, 0, 0)),
        ),
        compiler_params=pltpu.CompilerParams(
            dimension_semantics=("parallel",)),
    )(x_flat, params["g_cat"], params["mh_cat"], params["bias"])

    # (N, Hout, Wout*C_out) -> (N, C_out, Hout, Wout): reshape is metadata-only,
    # the transpose is cheap wrapper plumbing (keeps the kernel store lane-dense).
    return out_flat.reshape(N, Hout, Wout, C_out).transpose(0, 3, 1, 2)


# ---------------------------- pure-JAX reference ------------------------------
def _ref_upsample2x(x):
    """nn.Upsample(scale_factor=2, mode='bilinear', align_corners=False) on NCHW."""
    def src(size):
        o = np.arange(2 * size, dtype=np.float64)
        s = np.maximum((o + 0.5) / 2.0 - 0.5, 0.0)
        i0 = np.floor(s).astype(np.int32)
        lam = (s - i0).astype(np.float32)
        i1 = np.minimum(i0 + 1, size - 1).astype(np.int32)
        i0 = np.minimum(i0, size - 1).astype(np.int32)
        return i0, i1, lam

    _, _, H, W = x.shape
    h0, h1, lh = src(H)
    w0, w1, lw = src(W)
    lh = jnp.asarray(lh)[None, None, :, None]
    lw = jnp.asarray(lw)[None, None, None, :]
    xh = (1.0 - lh) * x[:, :, h0, :] + lh * x[:, :, h1, :]
    return (1.0 - lw) * xh[:, :, :, w0] + lw * xh[:, :, :, w1]


def _ref_forward(x, w_oihw, conv_bias, gamma, beta, mean, var):
    up = _ref_upsample2x(x)
    y = jax.lax.conv_general_dilated(
        up, w_oihw, window_strides=(1, 1), padding="SAME",
        dimension_numbers=("NCHW", "OIHW", "NCHW"))
    y = y + conv_bias[None, :, None, None]
    inv = gamma / jnp.sqrt(var + _EPS)
    return (y - mean[None, :, None, None]) * inv[None, :, None, None] \
        + beta[None, :, None, None]


# ------------------------------------ main ------------------------------------
if __name__ == "__main__":
    feature = 4
    N, H, W = 2, 16, 16
    C_in, C_out = 2 * feature, feature            # Conv2d(2*feature -> feature)

    key = jax.random.PRNGKey(0)
    ks = jax.random.split(key, 7)
    w_oihw = 0.1 * jax.random.normal(ks[0], (C_out, C_in, 3, 3), jnp.float32)
    conv_b = 0.1 * jax.random.normal(ks[1], (C_out,), jnp.float32)
    gamma = 1.0 + 0.1 * jax.random.normal(ks[2], (C_out,), jnp.float32)
    beta = 0.1 * jax.random.normal(ks[3], (C_out,), jnp.float32)
    mean = 0.1 * jax.random.normal(ks[4], (C_out,), jnp.float32)
    var = jax.random.uniform(ks[5], (C_out,), jnp.float32, 0.5, 1.5)
    x = jax.random.normal(ks[6], (N, C_in, H, W), jnp.float32)

    params = prepare_params(w_oihw, conv_b, gamma, beta, mean, var, H=H, W=W)

    out = upsample_plus_conv(x, params)
    out = jax.block_until_ready(out)

    ref = _ref_forward(x, w_oihw, conv_b, gamma, beta, mean, var)
    ref = jax.block_until_ready(ref)

    assert out.shape == (N, C_out, 2 * H, 2 * W)
    err = float(jnp.max(jnp.abs(out - ref)))
    # bf16 input/weights with f32 accumulation: abs error stays well below this.
    assert err < 5e-2, f"mismatch vs JAX reference: {err}"
    print("KERNEL_OK")
</pallas_src>

<mosaic_0001>
module attributes {stable_mosaic.version = 11 : i64} {
  func.func @_upsample_conv_kernel(%arg0: i32, %arg1: memref<1x16x128xbf16, #tpu.memory_space<vmem>>, %arg2: memref<128x384xbf16, #tpu.memory_space<vmem>>, %arg3: memref<32x48xf32, #tpu.memory_space<vmem>>, %arg4: memref<1x128xf32, #tpu.memory_space<vmem>>, %arg5: memref<1x32x128xf32, #tpu.memory_space<vmem>>) attributes {dimension_semantics = [#tpu.dimension_semantics<parallel>], iteration_bounds = array<i64: 2>, scalar_prefetch = 0 : i64, scratch_operands = 0 : i64, tpu.core_type = #tpu.core_type<tc>, window_params = [{transform_indices = @transform_0, window_bounds = array<i64: 1, 16, 128>}, {pipeline_mode = #tpu.pipeline_mode<synchronous>, transform_indices = @transform_1, window_bounds = array<i64: 128, 384>}, {pipeline_mode = #tpu.pipeline_mode<synchronous>, transform_indices = @transform_2, window_bounds = array<i64: 32, 48>}, {pipeline_mode = #tpu.pipeline_mode<synchronous>, transform_indices = @transform_3, window_bounds = array<i64: 1, 128>}, {transform_indices = @transform_4, window_bounds = array<i64: 1, 32, 128>}]} {
    %c0 = arith.constant 0 : index
    %c0_0 = arith.constant 0 : index
    %c0_1 = arith.constant 0 : index
    %0 = vector.load %arg1[%c0, %c0_0, %c0_1] : memref<1x16x128xbf16, #tpu.memory_space<vmem>>, vector<1x16x128xbf16>
    %1 = vector.shape_cast %0 : vector<1x16x128xbf16> to vector<16x128xbf16>
    %c0_2 = arith.constant 0 : index
    %c0_3 = arith.constant 0 : index
    %2 = vector.load %arg2[%c0_2, %c0_3] : memref<128x384xbf16, #tpu.memory_space<vmem>>, vector<128x384xbf16>
    %cst = arith.constant dense<0.000000e+00> : vector<16x384xf32>
    %3 = tpu.matmul %1, %2, %cst {dimension_numbers = #tpu.dot_dimension_numbers<[1], [0], [0], [1], [0, 0, 1, 1], [], []>} : vector<16x128xbf16>, vector<128x384xbf16>, vector<16x384xf32> -> vector<16x384xf32>
    %4 = vector.extract_strided_slice %3 {offsets = [0, 0], sizes = [16, 128], strides = [1, 1]} : vector<16x384xf32> to vector<16x128xf32>
    %5 = vector.extract_strided_slice %3 {offsets = [0, 128], sizes = [16, 128], strides = [1, 1]} : vector<16x384xf32> to vector<16x128xf32>
    %6 = vector.extract_strided_slice %3 {offsets = [0, 256], sizes = [16, 128], strides = [1, 1]} : vector<16x384xf32> to vector<16x128xf32>
    %7 = tpu.concatenate %4, %5, %6 in 0 : vector<16x128xf32>, vector<16x128xf32>, vector<16x128xf32> -> vector<48x128xf32>
    %c0_4 = arith.constant 0 : index
    %c0_5 = arith.constant 0 : index
    %8 = vector.load %arg3[%c0_4, %c0_5] : memref<32x48xf32, #tpu.memory_space<vmem>>, vector<32x48xf32>
    %cst_6 = arith.constant dense<0.000000e+00> : vector<32x128xf32>
    %9 = tpu.matmul %8, %7, %cst_6 {dimension_numbers = #tpu.dot_dimension_numbers<[1], [0], [0], [1], [0, 0, 1, 1], [], []>} : vector<32x48xf32>, vector<48x128xf32>, vector<32x128xf32> -> vector<32x128xf32>
    %c0_7 = arith.constant 0 : index
    %c0_8 = arith.constant 0 : index
    %10 = vector.load %arg4[%c0_7, %c0_8] : memref<1x128xf32, #tpu.memory_space<vmem>>, vector<1x128xf32>
    %11 = vector.broadcast %10 : vector<1x128xf32> to vector<32x128xf32>
    %12 = arith.addf %9, %11 : vector<32x128xf32>
    %c0_9 = arith.constant 0 : index
    %c0_10 = arith.constant 0 : index
    %c0_11 = arith.constant 0 : index
    %13 = vector.load %arg5[%c0_9, %c0_10, %c0_11] : memref<1x32x128xf32, #tpu.memory_space<vmem>>, vector<1x32x128xf32>
    %14 = vector.shape_cast %13 : vector<1x32x128xf32> to vector<32x128xf32>
    %15 = vector.shape_cast %12 : vector<32x128xf32> to vector<1x32x128xf32>
    tpu.vector_store %arg5[%c0_9, %c0_10, %c0_11], %15 {strides = array<i32>} : memref<1x32x128xf32, #tpu.memory_space<vmem>>, vector<1x32x128xf32>,
    return
  }
  func.func @transform_0(%arg0: i32) -> (i32, i32, i32) {
    %c0_i32 = arith.constant 0 : i32
    %c0_i32_0 = arith.constant 0 : i32
    %c0_i32_1 = arith.constant 0 : i32
    return %arg0, %c0_i32, %c0_i32_0 : i32, i32, i32
  }
  func.func @transform_1(%arg0: i32) -> (i32, i32) {
    %c0_i32 = arith.constant 0 : i32
    %c0_i32_0 = arith.constant 0 : i32
    %c0_i32_1 = arith.constant 0 : i32
    return %c0_i32, %c0_i32_0 : i32, i32
  }
  func.func @transform_2(%arg0: i32) -> (i32, i32) {
    %c0_i32 = arith.constant 0 : i32
    %c0_i32_0 = arith.constant 0 : i32
    %c0_i32_1 = arith.constant 0 : i32
    return %c0_i32, %c0_i32_0 : i32, i32
  }
  func.func @transform_3(%arg0: i32) -> (i32, i32) {
    %c0_i32 = arith.constant 0 : i32
    %c0_i32_0 = arith.constant 0 : i32
    %c0_i32_1 = arith.constant 0 : i32
    return %c0_i32, %c0_i32_0 : i32, i32
  }
  func.func @transform_4(%arg0: i32) -> (i32, i32, i32) {
    %c0_i32 = arith.constant 0 : i32
    %c0_i32_0 = arith.constant 0 : i32
    %c0_i32_1 = arith.constant 0 : i32
    return %arg0, %c0_i32, %c0_i32_0 : i32, i32, i32
  }
}

</mosaic_0001>

<llo_original>
// kernel: tpu_custom_call.1
$region0: #{tpu_custom_call.1}
  #allocation0 [shape = 'u32[]', space=smem, size = 0x4, offset = 0x4, fixed_abs, tag = 'smem constant byte address 0x4 - core index']
  #allocation1 [shape = 'u32[144,128]{1,0:T(1,128)}', space=vmem, size = 0x12000, scoped, tag = 'internal scratch']
  %s0 = inlined_call_operand.hbm [shape: bf16[2,16,128], index: 0, kind: input, shape index: {}]
  %s1 = inlined_call_operand.hbm [shape: bf16[128,384], index: 1, kind: input, shape index: {}]
  %s2 = inlined_call_operand.hbm [shape: f32[32,48], index: 2, kind: input, shape index: {}]
  %s3 = inlined_call_operand.vmem [shape: f32[1,128], index: 3, kind: input, shape index: {}]
  %s4 = inlined_call_operand.hbm [shape: f32[2,32,128], index: 4, kind: output, shape index: {}]
  %s5 = sld [smem:[#allocation0]]
  $region61: #{tpu_custom_call.1} parent=0
    _
  %s7 = ssub.s32 1, %s5
  %s8 = scalar_select 0, %s7, %s5
  $region1: #{tpu_custom_call.1} parent=0
    #allocation2 [shape = 'u8[8192]{0}', space=vmem, size = 0x2000, scoped, tag = 'input window, operand 0']
    #allocation3 [shape = 's32[2]{0}', space=sflag, size = 0x8, scoped, tag = 'scoped memory for tpu_custom_call.1']
    #allocation4 [shape = 's32[2]{0}', space=sflag, size = 0x8, scoped, tag = 'scoped memory for tpu_custom_call.1']
    #allocation5 [shape = 'u8[98304]{0}', space=vmem, size = 0x18000, scoped, tag = 'input window, operand 1, single buffered']
    #allocation6 [shape = 's32[1]{0}', space=sflag, size = 0x4, scoped, tag = 'scoped memory for tpu_custom_call.1']
    #allocation7 [shape = 'u8[16384]{0}', space=vmem, size = 0x4000, scoped, tag = 'input window, operand 2, single buffered']
    #allocation8 [shape = 'u8[32768]{0}', space=vmem, size = 0x8000, scoped, tag = 'output window, operand 0']
    %9 = vsyncpa [#allocation3], 0
    %s10 = scalar_lea.sflag [#allocation3], 1
    %11 = vsyncpa %s10, 0
    %12 = vsyncpa [#allocation6], 0
    %13 = vsyncpa [#allocation4], 0
    %s14 = scalar_lea.sflag [#allocation4], 1
    %15 = vsyncpa %s14, 0
    loop: start=0, step=1, limit=4
    $region2: #{tpu_custom_call.1} parent=1 // loop_pre_header
      _
    $region3: #{tpu_custom_call.1} parent=1 // loop_header
      %s17 = sphi 0, %s21
      %p18 = scmp.ge.s32.totalorder %s17, 4
      %s27 = sphi 0, %s29
      %s30 = sphi 0, %s27
      %s31 = sphi 0, %s30
      %s47 = sphi 0, %s31
      %s51 = sphi 0, %s51
      %s53 = sphi 0, %s51
      %s54 = sphi 0, %s53
      %s68 = sphi 0, %s54
      %s72 = sphi 0, %s72
      %s74 = sphi 0, %s72
      %s75 = sphi 0, %s74
      %s89 = sphi 0, %s75
      %s93 = sphi 0, %s93
      %s95 = sphi 0, %s93
      %s96 = sphi 0, %s95
      %s110 = sphi 0, %s96
      %s116 = sphi 0, %s118
      %s119 = sphi 0, %s116
      %s120 = sphi 0, %s119
      %s136 = sphi 0, %s120
    $region4: #{tpu_custom_call.1} parent=1 // loop_header_branch
      %20 = sbr.rel (%p18) target = $region8
    $region5: #{tpu_custom_call.1} parent=1 // loop_body
      %s22 = ssub.s32 %s17, 1
      %s23 = ssub.s32 %s17, 2
      %s24 = sadd.s32 %s17, 1
      %s25 = ssub.s32 %s17, %s24
      %p26 = scmp.eq.s32.totalorder %s25, 0
      %s28 = sadd.s32 %s27, 1
      %s29 = scalar_select %p26, %s27, %s28
      %p32 = pneg %p26
      %p33 = scmp.eq.s32.totalorder %s17, 1
      %p34 = por %p32, %p33
      %p35 = scmp.ne.s32.totalorder %s27, %s30
      %p36 = scmp.eq.s32.totalorder %s17, 0
      %p37 = por %p35, %p36
      %p38 = scmp.ne.s32.totalorder %s27, %s30
      %p39 = scmp.eq.s32.totalorder %s22, 1
      %p40 = por %p38, %p39
      %p41 = scmp.ne.s32.totalorder %s30, %s31
      %p42 = scmp.eq.s32.totalorder %s22, 0
      %p43 = por %p41, %p42
      %p44 = scmp.ne.s32.totalorder %s30, %s31
      %p45 = scmp.eq.s32.totalorder %s23, 1
      %p46 = por %p44, %p45
      %p48 = scmp.ne.s32.totalorder %s31, %s47
      %p49 = scmp.eq.s32.totalorder %s23, 0
      %p50 = por %p48, %p49
      %s52 = sadd.s32 %s51, 1
      %p55 = scmp.eq.s32.totalorder %s17, 1
      %p56 = scmp.ne.s32.totalorder %s51, %s53
      %p57 = scmp.eq.s32.totalorder %s17, 0
      %p58 = por %p56, %p57
      %p59 = scmp.ne.s32.totalorder %s51, %s53
      %p60 = scmp.eq.s32.totalorder %s22, 1
      %p61 = por %p59, %p60
      %p62 = scmp.ne.s32.totalorder %s53, %s54
      %p63 = scmp.eq.s32.totalorder %s22, 0
      %p64 = por %p62, %p63
      %p65 = scmp.ne.s32.totalorder %s53, %s54
      %p66 = scmp.eq.s32.totalorder %s23, 1
      %p67 = por %p65, %p66
      %p69 = scmp.ne.s32.totalorder %s54, %s68
      %p70 = scmp.eq.s32.totalorder %s23, 0
      %p71 = por %p69, %p70
      %s73 = sadd.s32 %s72, 1
      %p76 = scmp.eq.s32.totalorder %s17, 1
      %p77 = scmp.ne.s32.totalorder %s72, %s74
      %p78 = scmp.eq.s32.totalorder %s17, 0
      %p79 = por %p77, %p78
      %p80 = scmp.ne.s32.totalorder %s72, %s74
      %p81 = scmp.eq.s32.totalorder %s22, 1
      %p82 = por %p80, %p81
      %p83 = scmp.ne.s32.totalorder %s74, %s75
      %p84 = scmp.eq.s32.totalorder %s22, 0
      %p85 = por %p83, %p84
      %p86 = scmp.ne.s32.totalorder %s74, %s75
      %p87 = scmp.eq.s32.totalorder %s23, 1
      %p88 = por %p86, %p87
      %p90 = scmp.ne.s32.totalorder %s75, %s89
      %p91 = scmp.eq.s32.totalorder %s23, 0
      %p92 = por %p90, %p91
      %s94 = sadd.s32 %s93, 1
      %p97 = scmp.eq.s32.totalorder %s17, 1
      %p98 = scmp.ne.s32.totalorder %s93, %s95
      %p99 = scmp.eq.s32.totalorder %s17, 0
      %p100 = por %p98, %p99
      %p101 = scmp.ne.s32.totalorder %s93, %s95
      %p102 = scmp.eq.s32.totalorder %s22, 1
      %p103 = por %p101, %p102
      %p104 = scmp.ne.s32.totalorder %s95, %s96
      %p105 = scmp.eq.s32.totalorder %s22, 0
      %p106 = por %p104, %p105
      %p107 = scmp.ne.s32.totalorder %s95, %s96
      %p108 = scmp.eq.s32.totalorder %s23, 1
      %p109 = por %p107, %p108
      %p111 = scmp.ne.s32.totalorder %s96, %s110
      %p112 = scmp.eq.s32.totalorder %s23, 0
      %p113 = por %p111, %p112
      %s114 = ssub.s32 %s17, %s24
      %p115 = scmp.eq.s32.totalorder %s114, 0
      %s117 = sadd.s32 %s116, 1
      %s118 = scalar_select %p115, %s116, %s117
      %p121 = pneg %p115
      %p122 = scmp.eq.s32.totalorder %s17, 1
      %p123 = por %p121, %p122
      %p124 = scmp.ne.s32.totalorder %s116, %s119
      %p125 = scmp.eq.s32.totalorder %s17, 0
      %p126 = por %p124, %p125
      %p127 = scmp.ne.s32.totalorder %s116, %s119
      %p128 = scmp.eq.s32.totalorder %s22, 1
      %p129 = por %p127, %p128
      %p130 = scmp.ne.s32.totalorder %s119, %s120
      %p131 = scmp.eq.s32.totalorder %s22, 0
      %p132 = por %p130, %p131
      %p133 = scmp.ne.s32.totalorder %s119, %s120
      %p134 = scmp.eq.s32.totalorder %s23, 1
      %p135 = por %p133, %p134
      %p137 = scmp.ne.s32.totalorder %s120, %s136
      %p138 = scmp.eq.s32.totalorder %s23, 0
      %p139 = por %p137, %p138
      %p140 = scmp.le.s32.totalorder 1, %s17
      %p141 = scmp.lt.s32.totalorder %s17, 3
      %p142 = pnand %p140, %p141
      %p143 = pneg %p142
      // Predicated region
      $region9: #{tpu_custom_call.1} parent=5 // pred_check
        _
      $region10: #{tpu_custom_call.1} parent=5 // pred_check_branch
        %145 = sbr.rel (%p142) target = $region12
      $region11: #{tpu_custom_call.1} parent=5 // pred_region
        %s146 = ssub.s32 %s17, 1
        // Predicated region
        $region13: #{tpu_custom_call.1} parent=11 // pred_check
          %p147 = pneg %p64
        $region14: #{tpu_custom_call.1} parent=11 // pred_check_branch
          %149 = sbr.rel (%p147) target = $region16
        $region15: #{tpu_custom_call.1} parent=11 // pred_region
          %s151 = ssub.s32 3072, 3072
          %152 = vsyncadd [#allocation6], %s151
          %s153 = sshll.u32 [#allocation5], 4
          %s154 = int_to_ptr.vmem [resolvable:$true] %s153
          %159 = dma.hbm_to_vmem [thread:$0]  %s1, 3072, %s154, [#allocation6], 192, 192, 12
        $region16: #{tpu_custom_call.1} parent=11 // pred_fallthru
          _
        // Predicated region
        $region17: #{tpu_custom_call.1} parent=11 // pred_check
          %p160 = pneg %p85
        $region18: #{tpu_custom_call.1} parent=11 // pred_check_branch
          %162 = sbr.rel (%p160) target = $region20
        $region19: #{tpu_custom_call.1} parent=11 // pred_region
          %s164 = ssub.s32 512, 512
          %165 = vsyncadd [#allocation6], %s164
          %s166 = sshll.u32 [#allocation7], 4
          %s167 = int_to_ptr.vmem [resolvable:$true] %s166
          %172 = dma.hbm_to_vmem [thread:$0]  %s2, 512, %s167, [#allocation6], 128, 128, 8
        $region20: #{tpu_custom_call.1} parent=11 // pred_fallthru
          _
        // Predicated region
        $region21: #{tpu_custom_call.1} parent=11 // pred_check
          %p173 = pneg %p106
        $region22: #{tpu_custom_call.1} parent=11 // pred_check_branch
          %175 = sbr.rel (%p173) target = $region24
        $region23: #{tpu_custom_call.1} parent=11 // pred_region
          _
        $region24: #{tpu_custom_call.1} parent=11 // pred_fallthru
          _
      $region12: #{tpu_custom_call.1} parent=5 // pred_fallthru
        _
      %p176 = scmp.lt.s32.totalorder %s17, 2
      // Predicated region
      $region25: #{tpu_custom_call.1} parent=5 // pred_check
        %p177 = pneg %p176
      $region26: #{tpu_custom_call.1} parent=5 // pred_check_branch
        %179 = sbr.rel (%p177) target = $region28
      $region27: #{tpu_custom_call.1} parent=5 // pred_region
        // Predicated region
        $region29: #{tpu_custom_call.1} parent=27 // pred_check
          %p180 = pneg %p37
        $region30: #{tpu_custom_call.1} parent=27 // pred_check_branch
          %182 = sbr.rel (%p180) target = $region32
        $region31: #{tpu_custom_call.1} parent=27 // pred_region
          %s183 = sand.u32 %s27, 1
          %s184 = scalar_lea.sflag [#allocation3], %s183
          %s185 = sand.u32 %s27, 1
          %s186 = smul.addr %s185, 8
          %s187 = scalar_lea.vmem [#allocation2], %s186
          %s189 = ssub.s32 128, 128
          %190 = vsyncadd %s184, %s189
          %s191 = smul.addr %s17, 2
          %s192 = smul.addr %s191, 64
          %s193 = scalar_lea.hbm %s0, %s192
          %s194 = sshll.u32 %s187, 4
          %s195 = int_to_ptr.vmem [resolvable:$true] %s194
          %200 = dma.hbm_to_vmem [thread:$0]  %s193, 128, %s195, %s184, 64, 64, 4
        $region32: #{tpu_custom_call.1} parent=27 // pred_fallthru
          _
      $region28: #{tpu_custom_call.1} parent=5 // pred_fallthru
        _
      %p201 = scmp.le.s32.totalorder 1, %s17
      %p202 = scmp.lt.s32.totalorder %s17, 3
      %p203 = pnand %p201, %p202
      %p204 = pneg %p203
      // Predicated region
      $region33: #{tpu_custom_call.1} parent=5 // pred_check
        _
      $region34: #{tpu_custom_call.1} parent=5 // pred_check_branch
        %206 = sbr.rel (%p203) target = $region36
      $region35: #{tpu_custom_call.1} parent=5 // pred_region
        %s207 = ssub.s32 %s17, 1
        %s208 = sand.u32 %s30, 1
        %s209 = scalar_lea.sflag [#allocation3], %s208
        %s210 = sand.u32 %s30, 1
        %s211 = smul.addr %s210, 8
        %s212 = scalar_lea.vmem [#allocation2], %s211
        // Predicated region
        $region37: #{tpu_custom_call.1} parent=35 // pred_check
          %p213 = pneg %p43
        $region38: #{tpu_custom_call.1} parent=35 // pred_check_branch
          %215 = sbr.rel (%p213) target = $region40
        $region39: #{tpu_custom_call.1} parent=35 // pred_region
          %216 = dma.done %s209, 128
        $region40: #{tpu_custom_call.1} parent=35 // pred_fallthru
          _
        // Predicated region
        $region41: #{tpu_custom_call.1} parent=35 // pred_check
          %p217 = pneg %p64
        $region42: #{tpu_custom_call.1} parent=35 // pred_check_branch
          %219 = sbr.rel (%p217) target = $region44
        $region43: #{tpu_custom_call.1} parent=35 // pred_region
          %220 = dma.done [#allocation6], 3072
        $region44: #{tpu_custom_call.1} parent=35 // pred_fallthru
          _
        // Predicated region
        $region45: #{tpu_custom_call.1} parent=35 // pred_check
          %p221 = pneg %p85
        $region46: #{tpu_custom_call.1} parent=35 // pred_check_branch
          %223 = sbr.rel (%p221) target = $region48
        $region47: #{tpu_custom_call.1} parent=35 // pred_region
          %224 = dma.done [#allocation6], 512
        $region48: #{tpu_custom_call.1} parent=35 // pred_fallthru
          _
        %s225 = sand.u32 %s30, 1
        %s226 = scalar_lea.sflag [#allocation3], %s225
        %s227 = sand.u32 %s30, 1
        %s228 = smul.addr %s227, 8
        %s229 = scalar_lea.vmem [#allocation2], %s228
        %p230 = pneg %p43
        %p231 = pneg %p40
        %p232 = pneg %p64
        %p233 = pneg %p61
        %p234 = pneg %p85
        %p235 = pneg %p82
        %p236 = pneg %p106
        %p237 = pneg %p103
        %p238 = pneg %p132
        %p239 = pneg %p129
        %s240 = sand.u32 %s119, 1
        %s241 = scalar_lea.sflag [#allocation4], %s240
        %s242 = sand.u32 %s119, 1
        %s243 = smul.addr %s242, 32
        %s244 = scalar_lea.vmem [#allocation8], %s243
        %v246 = vld [vmem:[%s212] sm:$0xf]
        %v247 = vld [vmem:[%s212 + $0x4] sm:$0xf]
        %v248 = vld [vmem:[#allocation5] sm:$0xff]
        %v249 = vld [vmem:[#allocation5 + $0x8] sm:$0xf]
        %v250 = vld [vmem:[#allocation5 + $0xc] sm:$0xff]
        %v251 = vld [vmem:[#allocation5 + $0x14] sm:$0xf]
        %v252 = vld [vmem:[#allocation5 + $0x18] sm:$0xff]
        %v253 = vld [vmem:[#allocation5 + $0x20] sm:$0xf]
        %v254 = vld [vmem:[#allocation5 + $0x24] sm:$0xff]
        %v255 = vld [vmem:[#allocation5 + $0x2c] sm:$0xf]
        %v256 = vld [vmem:[#allocation5 + $0x30] sm:$0xff]
        %v257 = vld [vmem:[#allocation5 + $0x38] sm:$0xf]
        %v258 = vld [vmem:[#allocation5 + $0x3c] sm:$0xff]
        %v259 = vld [vmem:[#allocation5 + $0x44] sm:$0xf]
        %v260 = vld [vmem:[#allocation5 + $0x48] sm:$0xff]
        %v261 = vld [vmem:[#allocation5 + $0x50] sm:$0xf]
        %v262 = vld [vmem:[#allocation5 + $0x54] sm:$0xff]
        %v263 = vld [vmem:[#allocation5 + $0x5c] sm:$0xf]
        %v264 = vld [vmem:[#allocation5 + $0x60] sm:$0xff]
        %v265 = vld [vmem:[#allocation5 + $0x68] sm:$0xf]
        %v266 = vld [vmem:[#allocation5 + $0x6c] sm:$0xff]
        %v267 = vld [vmem:[#allocation5 + $0x74] sm:$0xf]
        %v268 = vld [vmem:[#allocation5 + $0x78] sm:$0xff]
        %v269 = vld [vmem:[#allocation5 + $0x80] sm:$0xf]
        %v270 = vld [vmem:[#allocation5 + $0x84] sm:$0xff]
        %v271 = vld [vmem:[#allocation5 + $0x8c] sm:$0xf]
        %v272 = vld [vmem:[#allocation5 + $0x90] sm:$0xff]
        %v273 = vld [vmem:[#allocation5 + $0x98] sm:$0xf]
        %v274 = vld [vmem:[#allocation5 + $0x9c] sm:$0xff]
        %v275 = vld [vmem:[#allocation5 + $0xa4] sm:$0xf]
        %v276 = vld [vmem:[#allocation5 + $0xa8] sm:$0xff]
        %v277 = vld [vmem:[#allocation5 + $0xb0] sm:$0xf]
        %v278 = vld [vmem:[#allocation5 + $0xb4] sm:$0xff]
        %v279 = vld [vmem:[#allocation5 + $0xbc] sm:$0xf]
        %v282 = vunpack.c.l.b16 %v246
        %v283 = vunpack.c.l.b16 %v247
        %v284 = vpack.c.b16 %v283, %v282
        %v318 = vunpack.c.l.b16 %v248
        %v319 = vunpack.c.h.b16 %v248
        %v320 = vunpack.c.l.b16 %v249
        %v321 = vunpack.c.l.b16 %v250
        %v322 = vunpack.c.h.b16 %v250
        %v323 = vunpack.c.l.b16 %v251
        %v324 = vunpack.c.l.b16 %v252
        %v325 = vunpack.c.h.b16 %v252
        %v326 = vunpack.c.l.b16 %v253
        %v327 = vunpack.c.l.b16 %v254
        %v328 = vunpack.c.h.b16 %v254
        %v329 = vunpack.c.l.b16 %v255
        %v330 = vunpack.c.l.b16 %v256
        %v331 = vunpack.c.h.b16 %v256
        %v332 = vunpack.c.l.b16 %v257
        %v333 = vunpack.c.l.b16 %v258
        %v334 = vunpack.c.h.b16 %v258
        %v335 = vunpack.c.l.b16 %v259
        %v336 = vunpack.c.l.b16 %v260
        %v337 = vunpack.c.h.b16 %v260
        %v338 = vunpack.c.l.b16 %v261
        %v339 = vunpack.c.l.b16 %v262
        %v340 = vunpack.c.h.b16 %v262
        %v341 = vunpack.c.l.b16 %v263
        %v342 = vunpack.c.l.b16 %v264
        %v343 = vunpack.c.h.b16 %v264
        %v344 = vunpack.c.l.b16 %v265
        %v345 = vunpack.c.l.b16 %v266
        %v346 = vunpack.c.h.b16 %v266
        %v347 = vunpack.c.l.b16 %v267
        %v348 = vunpack.c.l.b16 %v268
        %v349 = vunpack.c.h.b16 %v268
        %v350 = vunpack.c.l.b16 %v269
        %v351 = vunpack.c.l.b16 %v270
        %v352 = vunpack.c.h.b16 %v270
        %v353 = vunpack.c.l.b16 %v271
        %v354 = vunpack.c.l.b16 %v272
        %v355 = vunpack.c.h.b16 %v272
        %v356 = vunpack.c.l.b16 %v273
        %v357 = vunpack.c.l.b16 %v274
        %v358 = vunpack.c.h.b16 %v274
        %v359 = vunpack.c.l.b16 %v275
        %v360 = vunpack.c.l.b16 %v276
        %v361 = vunpack.c.h.b16 %v276
        %v362 = vunpack.c.l.b16 %v277
        %v363 = vunpack.c.l.b16 %v278
        %v364 = vunpack.c.h.b16 %v278
        %v365 = vunpack.c.l.b16 %v279
        %v366 = vpack.c.b16 %v321, %v318
        %v367 = vpack.c.b16 %v322, %v319
        %v368 = vpack.c.b16 %v323, %v320
        %v369 = vpack.c.b16 %v327, %v324
        %v370 = vpack.c.b16 %v328, %v325
        %v371 = vpack.c.b16 %v329, %v326
        %v372 = vpack.c.b16 %v333, %v330
        %v373 = vpack.c.b16 %v334, %v331
        %v374 = vpack.c.b16 %v335, %v332
        %v375 = vpack.c.b16 %v339, %v336
        %v376 = vpack.c.b16 %v340, %v337
        %v377 = vpack.c.b16 %v341, %v338
        %v378 = vpack.c.b16 %v345, %v342
        %v379 = vpack.c.b16 %v346, %v343
        %v380 = vpack.c.b16 %v347, %v344
        %v381 = vpack.c.b16 %v351, %v348
        %v382 = vpack.c.b16 %v352, %v349
        %v383 = vpack.c.b16 %v353, %v350
        %v384 = vpack.c.b16 %v357, %v354
        %v385 = vpack.c.b16 %v358, %v355
        %v386 = vpack.c.b16 %v359, %v356
        %v387 = vpack.c.b16 %v363, %v360
        %v388 = vpack.c.b16 %v364, %v361
        %v389 = vpack.c.b16 %v365, %v362
        %414 = vmatprep.subr.bf16.mxu0 %v367
        %415 = vmatpush1.bf16.msra.mxu0 %v366
        %416 = vmatprep.subr.bf16.mxu0 %v370
        %417 = vmatpush1.bf16.msra.mxu0 %v369
        %418 = vmatprep.subr.bf16.mxu0 %v373
        %419 = vmatpush1.bf16.msra.mxu0 %v372
        %420 = vmatprep.subr.bf16.mxu0 %v376
        %421 = vmatpush1.bf16.msra.mxu0 %v375
        %422 = vmatprep.subr.bf16.mxu0 %v379
        %423 = vmatpush1.bf16.msra.mxu0 %v378
        %424 = vmatprep.subr.bf16.mxu0 %v382
        %425 = vmatpush1.bf16.msra.mxu0 %v381
        %426 = vmatprep.subr.bf16.mxu0 %v385
        %427 = vmatpush1.bf16.msra.mxu0 %v384
        %428 = vmatprep.subr.bf16.mxu0 %v388
        %429 = vmatpush1.bf16.msra.mxu0 %v387
        %430 = vmatprep.subr.bf16.mxu0 0
        %431 = vmatpush1.bf16.msra.mxu0 0
        %432 = vmatprep.subr.bf16.mxu0 0
        %433 = vmatpush1.bf16.msra.mxu0 0
        %434 = vmatprep.subr.bf16.mxu0 0
        %435 = vmatpush1.bf16.msra.mxu0 0
        %436 = vmatprep.subr.bf16.mxu0 0
        %437 = vmatpush1.bf16.msra.mxu0 0
        %438 = vmatprep.subr.bf16.mxu0 0
        %439 = vmatpush1.bf16.msra.mxu0 0
        %440 = vmatprep.subr.bf16.mxu0 0
        %441 = vmatpush1.bf16.msra.mxu0 0
        %442 = vmatprep.subr.bf16.mxu0 0
        %443 = vmatpush1.bf16.msra.mxu0 0
        %444 = vmatprep.subr.bf16.mxu0 0
        %445 = vmatpush1.bf16.msra.mxu0 0
        %446 = vmatprep.mubr.bf16.mxu0 0
        %447 = vmatmul.mubr.bf16.gmra.mrb[0].mxu0 %v284
        %v448 = vpop.f32.mrb[0].mxu0
        %v449 = vadd.f32 0.0, %v448
        %v450 = vpop.f32.mrb[0].mxu0
        %v451 = vadd.f32 0.0, %v450
        %v452 = vpop.f32.mrb[0].mxu0
        %v453 = vadd.f32 0.0, %v452
        %v454 = vpop.f32.mrb[0].mxu0
        %v455 = vadd.f32 0.0, %v454
        %456 = vdwg.mxu0
        %457 = vmatprep.subr.bf16.mxu0 0
        %458 = vmatpush1.bf16.msra.mxu0 %v368
        %459 = vmatprep.subr.bf16.mxu0 0
        %460 = vmatpush1.bf16.msra.mxu0 %v371
        %461 = vmatprep.subr.bf16.mxu0 0
        %462 = vmatpush1.bf16.msra.mxu0 %v374
        %463 = vmatprep.subr.bf16.mxu0 0
        %464 = vmatpush1.bf16.msra.mxu0 %v377
        %465 = vmatprep.subr.bf16.mxu0 0
        %466 = vmatpush1.bf16.msra.mxu0 %v380
        %467 = vmatprep.subr.bf16.mxu0 0
        %468 = vmatpush1.bf16.msra.mxu0 %v383
        %469 = vmatprep.subr.bf16.mxu0 0
        %470 = vmatpush1.bf16.msra.mxu0 %v386
        %471 = vmatprep.subr.bf16.mxu0 0
        %472 = vmatpush1.bf16.msra.mxu0 %v389
        %473 = vmatprep.subr.bf16.mxu0 0
        %474 = vmatpush1.bf16.msra.mxu0 0
        %475 = vmatprep.subr.bf16.mxu0 0
        %476 = vmatpush1.bf16.msra.mxu0 0
        %477 = vmatprep.subr.bf16.mxu0 0
        %478 = vmatpush1.bf16.msra.mxu0 0
        %479 = vmatprep.subr.bf16.mxu0 0
        %480 = vmatpush1.bf16.msra.mxu0 0
        %481 = vmatprep.subr.bf16.mxu0 0
        %482 = vmatpush1.bf16.msra.mxu0 0
        %483 = vmatprep.subr.bf16.mxu0 0
        %484 = vmatpush1.bf16.msra.mxu0 0
        %485 = vmatprep.subr.bf16.mxu0 0
        %486 = vmatpush1.bf16.msra.mxu0 0
        %487 = vmatprep.subr.bf16.mxu0 0
        %488 = vmatpush1.bf16.msra.mxu0 0
        %489 = vmatprep.mubr.bf16.mxu0 0
        %490 = vmatmul.mubr.bf16.gmra.mrb[0].mxu0 %v284
        %v491 = vpop.f32.mrb[0].mxu0
        %v492 = vadd.f32 0.0, %v491
        %v493 = vpop.f32.mrb[0].mxu0
        %v494 = vpop.f32.mrb[0].mxu0
        %v495 = vadd.f32 0.0, %v494
        %v496 = vpop.f32.mrb[0].mxu0
        %497 = vdwg.mxu0
        %v498 = vld [vmem:[#allocation7] sm:$0xff]
        %v499 = vld [vmem:[#allocation7 + $0x8] sm:$0xff]
        %v500 = vld [vmem:[#allocation7 + $0x10] sm:$0xff]
        %v501 = vld [vmem:[#allocation7 + $0x18] sm:$0xff]
        %v502 = vld [vmem:[%s3] sm:$0x1]
        %v504 = vlaneseq
        %v505 = vshrl.u32 %v504, 7
        %v506 = vsub.s32 0, %v505
        %v507 = vrot.slane %v502, %v506
        %vm509 = vcmask 392192
        %v511 = vsel %vm509, %v498, 0
        %v514 = vsel %vm509, %v499, 0
        %v517 = vsel %vm509, %v500, 0
        %v520 = vsel %vm509, %v501, 0
        %522 = vmatprep.subr.mxu0 0.0
        %523 = vmatpush1.msra.mxu0 %v449
        %524 = vmatprep.subr.mxu0 0.0
        %525 = vmatpush1.msra.mxu0 %v453
        %526 = vmatprep.subr.mxu0 0.0
        %527 = vmatpush1.msra.mxu0 %v451
        %528 = vmatprep.subr.mxu0 0.0
        %529 = vmatpush1.msra.mxu0 %v455
        %530 = vmatprep.subr.mxu0 0.0
        %531 = vmatpush1.msra.mxu0 %v492
        %532 = vmatprep.subr.mxu0 0.0
        %533 = vmatpush1.msra.mxu0 %v495
        %534 = vmatprep.subr.mxu0 0.0
        %535 = vmatpush1.msra.mxu0 0.0
        %536 = vmatprep.subr.mxu0 0.0
        %537 = vmatpush1.msra.mxu0 0.0
        %538 = vmatprep.subr.mxu0 0.0
        %539 = vmatpush1.msra.mxu0 0.0
        %540 = vmatprep.subr.mxu0 0.0
        %541 = vmatpush1.msra.mxu0 0.0
        %542 = vmatprep.subr.mxu0 0.0
        %543 = vmatpush1.msra.mxu0 0.0
        %544 = vmatprep.subr.mxu0 0.0
        %545 = vmatpush1.msra.mxu0 0.0
        %546 = vmatprep.subr.mxu0 0.0
        %547 = vmatpush1.msra.mxu0 0.0
        %548 = vmatprep.subr.mxu0 0.0
        %549 = vmatpush1.msra.mxu0 0.0
        %550 = vmatprep.subr.mxu0 0.0
        %551 = vmatpush1.msra.mxu0 0.0
        %552 = vmatprep.subr.mxu0 0.0
        %553 = vmatpush1.msra.mxu0 0.0
        %554 = vmatprep.subr.mxu0 0.0
        %555 = vmatpush1.msra.mxu0 0.0
        %556 = vmatprep.subr.mxu0 0.0
        %557 = vmatpush1.msra.mxu0 0.0
        %558 = vmatprep.subr.mxu0 0.0
        %559 = vmatpush1.msra.mxu0 0.0
        %560 = vmatprep.subr.mxu0 0.0
        %561 = vmatpush1.msra.mxu0 0.0
        %562 = vmatprep.subr.mxu0 0.0
        %563 = vmatpush1.msra.mxu0 0.0
        %564 = vmatprep.subr.mxu0 0.0
        %565 = vmatpush1.msra.mxu0 0.0
        %566 = vmatprep.subr.mxu0 0.0
        %567 = vmatpush1.msra.mxu0 0.0
        %568 = vmatprep.subr.mxu0 0.0
        %569 = vmatpush1.msra.mxu0 0.0
        %570 = vmatprep.subr.mxu0 0.0
        %571 = vmatpush1.msra.mxu0 0.0
        %572 = vmatprep.subr.mxu0 0.0
        %573 = vmatpush1.msra.mxu0 0.0
        %574 = vmatprep.subr.mxu0 0.0
        %575 = vmatpush1.msra.mxu0 0.0
        %576 = vmatprep.subr.mxu0 0.0
        %577 = vmatpush1.msra.mxu0 0.0
        %578 = vmatprep.subr.mxu0 0.0
        %579 = vmatpush1.msra.mxu0 0.0
        %580 = vmatprep.subr.mxu0 0.0
        %581 = vmatpush1.msra.mxu0 0.0
        %582 = vmatprep.subr.mxu0 0.0
        %583 = vmatpush1.msra.mxu0 0.0
        %584 = vmatprep.subr.mxu0 0.0
        %585 = vmatpush1.msra.mxu0 0.0
        %586 = vmatprep.mubr.f32.mxu0 0.0
        %587 = vmatmul.mubr.f32.gmra.mrb[0].mxu0 %v511
        %v588 = vpop.f32.mrb[0].mxu0
        %v589 = vadd.f32 %v507, %v588
        %v590 = vpop.f32.mrb[0].mxu0
        %591 = vmatprep.mubr.f32.mxu0 0.0
        %592 = vmatmul.mubr.f32.gmra.mrb[0].mxu0 %v514
        %v593 = vpop.f32.mrb[0].mxu0
        %v594 = vadd.f32 %v507, %v593
        %v595 = vpop.f32.mrb[0].mxu0
        %596 = vmatprep.mubr.f32.mxu0 0.0
        %597 = vmatmul.mubr.f32.gmra.mrb[0].mxu0 %v517
        %v598 = vpop.f32.mrb[0].mxu0
        %v599 = vadd.f32 %v507, %v598
        %v600 = vpop.f32.mrb[0].mxu0
        %601 = vmatprep.mubr.f32.mxu0 0.0
        %602 = vmatmul.mubr.f32.gmra.mrb[0].mxu0 %v520
        %v603 = vpop.f32.mrb[0].mxu0
        %v604 = vadd.f32 %v507, %v603
        %v605 = vpop.f32.mrb[0].mxu0
        %606 = vdwg.mxu0
        %607 = vst [vmem:[%s244] sm:$0xff] %v589
        %608 = vst [vmem:[%s244 + $0x8] sm:$0xff] %v594
        %609 = vst [vmem:[%s244 + $0x10] sm:$0xff] %v599
        %610 = vst [vmem:[%s244 + $0x18] sm:$0xff] %v604
        %s611 = sand.u32 %s119, 1
        %s612 = scalar_lea.sflag [#allocation4], %s611
        %s613 = sand.u32 %s119, 1
        %s614 = smul.addr %s613, 32
        %s615 = scalar_lea.vmem [#allocation8], %s614
        // Predicated region
        $region49: #{tpu_custom_call.1} parent=35 // pred_check
          %p616 = pneg %p129
        $region50: #{tpu_custom_call.1} parent=35 // pred_check_branch
          %618 = sbr.rel (%p616) target = $region52
        $region51: #{tpu_custom_call.1} parent=35 // pred_region
          %s620 = ssub.s32 512, 512
          %621 = vsyncadd %s612, %s620
          %s622 = smul.addr %s22, 4
          %s623 = smul.addr %s622, 128
          %s624 = scalar_lea.hbm %s4, %s623
          %s625 = sshll.u32 %s615, 4
          %s626 = int_to_ptr.vmem [resolvable:$true] %s625
          %631 = dma.vmem_to_hbm [thread:$0]  %s626, 512, %s624, %s612, 128, 128, 8
        $region52: #{tpu_custom_call.1} parent=35 // pred_fallthru
          _
      $region36: #{tpu_custom_call.1} parent=5 // pred_fallthru
        _
      %p632 = scmp.le.s32.totalorder 2, %s17
      // Predicated region
      $region53: #{tpu_custom_call.1} parent=5 // pred_check
        %p633 = pneg %p632
      $region54: #{tpu_custom_call.1} parent=5 // pred_check_branch
        %635 = sbr.rel (%p633) target = $region56
      $region55: #{tpu_custom_call.1} parent=5 // pred_region
        %s636 = ssub.s32 %s17, 2
        // Predicated region
        $region57: #{tpu_custom_call.1} parent=55 // pred_check
          %p637 = pneg %p135
        $region58: #{tpu_custom_call.1} parent=55 // pred_check_branch
          %639 = sbr.rel (%p637) target = $region60
        $region59: #{tpu_custom_call.1} parent=55 // pred_region
          %s640 = sand.u32 %s120, 1
          %s641 = scalar_lea.sflag [#allocation4], %s640
          %s642 = sand.u32 %s120, 1
          %s643 = smul.addr %s642, 32
          %s644 = scalar_lea.vmem [#allocation8], %s643
          %645 = dma.done %s641, 512
        $region60: #{tpu_custom_call.1} parent=55 // pred_fallthru
          _
      $region56: #{tpu_custom_call.1} parent=5 // pred_fallthru
        _
    $region6: #{tpu_custom_call.1} parent=1 // loop_footer
      %s21 = sadd.s32 1, %s17
    $region7: #{tpu_custom_call.1} parent=1 // loop_footer_branch
      %16 = sbr.rel target = $region3
    $region8: #{tpu_custom_call.1} parent=1 // loop_exit
      _
    %646 = vsyncpa [#allocation3], 1
    %s647 = scalar_lea.sflag [#allocation3], 1
    %648 = vsyncpa %s647, 1
    %649 = vsyncpa [#allocation6], 1
    %650 = vsyncpa [#allocation4], 1
    %s651 = scalar_lea.sflag [#allocation4], 1
    %652 = vsyncpa %s651, 1

</llo_original>
